<compile_context>
chip_gen: v7x
topology: tpu7x:2x2x1
jax: 0.10.0
libtpu: 0.0.40
codegen_flags: <defaults>
</compile_context>

<pallas_src>
import functools

import jax
import jax.numpy as jnp
from jax.experimental import pallas as pl
from jax.experimental.pallas import tpu as pltpu


# Byte budget for the double-buffered in+out blocks (2 bufs * (in + out)).
_BLOCK_BYTE_BUDGET = 16 * 1024 * 1024
# Scoped-VMEM limit: above the 16/32 MiB defaults, below v7x's 64 MiB physical.
_VMEM_LIMIT_BYTES = 48 * 1024 * 1024


def _pick_tile(total: int, bytes_per_unit: int, align: int) -> int:
    """Largest tile (multiple of `align`) such that 4*tile*bytes_per_unit fits
    the VMEM block budget, clamped to `total` (a full-extent block needs no
    alignment)."""
    t = _BLOCK_BYTE_BUDGET // (4 * max(bytes_per_unit, 1))
    t = max(align, (t // align) * align)
    return total if t >= total else t


def _finish(xf, s, power, out_dtype):
    if power == 2:
        norm = jnp.sqrt(s)
    else:
        norm = s ** (1.0 / power)
    inv = pl.reciprocal(norm + 1e-7, approx=False)  # exact; kernel is mem-bound
    return (xf * inv).astype(out_dtype)


def _normalize_rows_kernel(x_ref, o_ref, *, power: int):
    """2-D path: block (tile_m, C), reduce over the lane (C) axis."""
    xf = x_ref[...].astype(jnp.float32)
    if power == 2:
        s = jnp.sum(xf * xf, axis=-1, keepdims=True)
    else:
        s = jnp.sum(xf ** power, axis=-1, keepdims=True)
    o_ref[...] = _finish(xf, s, power, o_ref.dtype)


def _normalize_cl_kernel(x_ref, o_ref, *, power: int):
    """Channel-major path: block (t_b, C, t_hw), reduce over the sublane (C) axis."""
    xf = x_ref[...].astype(jnp.float32)
    if power == 2:
        s = jnp.sum(xf * xf, axis=1, keepdims=True)
    else:
        s = jnp.sum(xf ** power, axis=1, keepdims=True)
    o_ref[...] = _finish(xf, s, power, o_ref.dtype)


def _normalize_2d(x2d, power: int = 2, tile_m: int | None = None):
    """x2d: (M, C) — normalize each row over the last (channel) axis."""
    M, C = x2d.shape
    itemsize = x2d.dtype.itemsize
    if tile_m is None:
        tile_m = _pick_tile(M, C * itemsize, 8)

    return pl.pallas_call(
        functools.partial(_normalize_rows_kernel, power=power),
        out_shape=jax.ShapeDtypeStruct((M, C), x2d.dtype),
        grid_spec=pltpu.PrefetchScalarGridSpec(
            num_scalar_prefetch=0,
            grid=(pl.cdiv(M, tile_m),),          # ragged last block: OOB writes masked
            in_specs=[pl.BlockSpec((tile_m, C), lambda i: (i, 0))],
            out_specs=pl.BlockSpec((tile_m, C), lambda i: (i, 0)),
        ),
        compiler_params=pltpu.CompilerParams(
            dimension_semantics=("parallel",),
            vmem_limit_bytes=_VMEM_LIMIT_BYTES),
    )(x2d)


def _normalize_nchw(x3, power: int = 2,
                    t_hw: int | None = None, t_b: int | None = None):
    """x3: (B, C, HW) — normalize over C for every (b, hw) column.

    C lives on the sublane axis, HW on the lane axis, so the output stays
    lane-dense even for small channel counts and no transpose is needed.
    When the full spatial extent fits in one block, multiple batch elements
    are packed per grid step to amortize per-step overhead."""
    B, C, HW = x3.shape
    itemsize = x3.dtype.itemsize
    if t_hw is None:
        t_hw = _pick_tile(HW, C * itemsize, 128)
    if t_b is None:
        if t_hw >= HW:
            # Whole spatial map fits — spend remaining budget on batch tiling.
            t_b = max(1, _BLOCK_BYTE_BUDGET // (4 * C * HW * itemsize))
            t_b = min(t_b, B)
        else:
            t_b = 1

    return pl.pallas_call(
        functools.partial(_normalize_cl_kernel, power=power),
        out_shape=jax.ShapeDtypeStruct((B, C, HW), x3.dtype),
        grid_spec=pltpu.PrefetchScalarGridSpec(
            num_scalar_prefetch=0,
            grid=(pl.cdiv(B, t_b), pl.cdiv(HW, t_hw)),   # ragged blocks: masked writes
            in_specs=[pl.BlockSpec((t_b, C, t_hw), lambda b, i: (b, 0, i))],
            out_specs=pl.BlockSpec((t_b, C, t_hw), lambda b, i: (b, 0, i)),
        ),
        compiler_params=pltpu.CompilerParams(
            dimension_semantics=("parallel", "parallel"),
            vmem_limit_bytes=_VMEM_LIMIT_BYTES),
    )(x3)


def normalize(x, power: int = 2):
    """Matches Normalize(power).forward(x): reduce over dim 1."""
    if x.ndim == 2:
        return _normalize_2d(x, power)
    if x.ndim >= 3:
        shape = x.shape
        B, C = shape[0], shape[1]
        hw = 1
        for d in shape[2:]:
            hw *= d
        # Contiguous reshape: free (no HBM traffic), unlike a transpose.
        out3 = _normalize_nchw(x.reshape(B, C, hw), power)
        return out3.reshape(shape)
    raise ValueError(f"Unsupported rank {x.ndim}; expected >= 2.")


def _normalize_ref(x, power: int = 2):
    norm = jnp.sum(x ** power, axis=1, keepdims=True) ** (1.0 / power)
    return x / (norm + 1e-7)


if __name__ == "__main__":
    key = jax.random.PRNGKey(0)
    k4, k2, k3, k5 = jax.random.split(key, 4)

    # 4-D NCHW feature map — tiled directly, no wrapper transposes.
    x4 = jax.random.normal(k4, (2, 4, 16, 16), dtype=jnp.float32)
    y4 = jax.block_until_ready(normalize(x4, power=2))
    assert jnp.allclose(y4, _normalize_ref(x4, 2), atol=1e-5, rtol=1e-5)

    # 2-D (N, C) patch features (CUT PatchNCE path).
    x2 = jax.random.normal(k2, (8, 32), dtype=jnp.float32)
    y2 = jax.block_until_ready(normalize(x2, power=2))
    assert jnp.allclose(y2, _normalize_ref(x2, 2), atol=1e-5, rtol=1e-5)

    # Ragged row-grid path (masked OOB writes) with a small explicit tile.
    x2r = jax.random.normal(k3, (20, 32), dtype=jnp.float32)
    y2r = jax.block_until_ready(_normalize_2d(x2r, power=2, tile_m=8))
    assert jnp.allclose(y2r, _normalize_ref(x2r, 2), atol=1e-5, rtol=1e-5)

    # Ragged lane-grid path (HW not a multiple of the 128-lane tile).
    x4r = jax.random.normal(k4, (1, 4, 10, 20), dtype=jnp.float32)
    y4r = jax.block_until_ready(
        _normalize_nchw(x4r.reshape(1, 4, 200), power=2, t_hw=128)
    ).reshape(1, 4, 10, 20)
    assert jnp.allclose(y4r, _normalize_ref(x4r, 2), atol=1e-5, rtol=1e-5)

    # Ragged batch-grid path (t_b > 1 with B not divisible by t_b).
    x4b = jax.random.normal(k5, (8, 4, 8, 8), dtype=jnp.float32)
    y4b = jax.block_until_ready(
        _normalize_nchw(x4b.reshape(8, 4, 64), power=2, t_b=3)
    ).reshape(8, 4, 8, 8)
    assert jnp.allclose(y4b, _normalize_ref(x4b, 2), atol=1e-5, rtol=1e-5)

    print("KERNEL_OK")
</pallas_src>

<mosaic_0001>
module attributes {stable_mosaic.version = 11 : i64} {
  func.func @_normalize_cl_kernel(%arg0: i32, %arg1: i32, %arg2: memref<2x4x256xf32, #tpu.memory_space<vmem>>, %arg3: memref<2x4x256xf32, #tpu.memory_space<vmem>>) attributes {dimension_semantics = [#tpu.dimension_semantics<parallel>, #tpu.dimension_semantics<parallel>], iteration_bounds = array<i64: 1, 1>, scalar_prefetch = 0 : i64, scratch_operands = 0 : i64, tpu.core_type = #tpu.core_type<tc>, window_params = [{transform_indices = @transform_0, window_bounds = array<i64: 2, 4, 256>}, {transform_indices = @transform_1, window_bounds = array<i64: 2, 4, 256>}]} {
    %c0 = arith.constant 0 : index
    %c0_0 = arith.constant 0 : index
    %c0_1 = arith.constant 0 : index
    %0 = vector.load %arg2[%c0, %c0_0, %c0_1] : memref<2x4x256xf32, #tpu.memory_space<vmem>>, vector<2x4x256xf32>
    %1 = arith.mulf %0, %0 : vector<2x4x256xf32>
    %cst = arith.constant dense<0.000000e+00> : vector<2x256xf32>
    %2 = vector.multi_reduction <add>, %1, %cst [1] : vector<2x4x256xf32> to vector<2x256xf32>
    %3 = vector.shape_cast %2 : vector<2x256xf32> to vector<2x1x256xf32>
    %4 = math.sqrt %3 : vector<2x1x256xf32>
    %cst_2 = arith.constant 1.000000e-07 : f32
    %5 = vector.broadcast %cst_2 : f32 to vector<2x1x256xf32>
    %6 = arith.addf %4, %5 : vector<2x1x256xf32>
    %7 = tpu.reciprocal %6 : vector<2x1x256xf32> -> vector<2x1x256xf32>
    %8 = vector.broadcast %7 : vector<2x1x256xf32> to vector<2x4x256xf32>
    %9 = arith.mulf %0, %8 : vector<2x4x256xf32>
    %c0_3 = arith.constant 0 : index
    %c0_4 = arith.constant 0 : index
    %c0_5 = arith.constant 0 : index
    %10 = vector.load %arg3[%c0_3, %c0_4, %c0_5] : memref<2x4x256xf32, #tpu.memory_space<vmem>>, vector<2x4x256xf32>
    tpu.vector_store %arg3[%c0_3, %c0_4, %c0_5], %9 {strides = array<i32>} : memref<2x4x256xf32, #tpu.memory_space<vmem>>, vector<2x4x256xf32>,
    return
  }
  func.func @transform_0(%arg0: i32, %arg1: i32) -> (i32, i32, i32) {
    %c0_i32 = arith.constant 0 : i32
    %c0_i32_0 = arith.constant 0 : i32
    return %arg0, %c0_i32, %arg1 : i32, i32, i32
  }
  func.func @transform_1(%arg0: i32, %arg1: i32) -> (i32, i32, i32) {
    %c0_i32 = arith.constant 0 : i32
    %c0_i32_0 = arith.constant 0 : i32
    return %arg0, %c0_i32, %arg1 : i32, i32, i32
  }
}

</mosaic_0001>

<llo_original>
// kernel: tpu_custom_call.1
$region0: #{tpu_custom_call.1}
  #allocation0 [shape = 'u32[]', space=smem, size = 0x4, offset = 0x4, fixed_abs, tag = 'smem constant byte address 0x4 - core index']
  #allocation1 [shape = 'u32[144,128]{1,0:T(1,128)}', space=vmem, size = 0x12000, scoped, tag = 'internal scratch']
  %s0 = inlined_call_operand.hbm [shape: f32[2,4,256], index: 0, kind: input, shape index: {}]
  %s1 = inlined_call_operand.hbm [shape: f32[2,4,256], index: 1, kind: output, shape index: {}]
  %s2 = sld [smem:[#allocation0]]
  $region18: #{tpu_custom_call.1} parent=0
    _
  %s4 = ssub.s32 1, %s2
  %s5 = scalar_select 0, %s4, %s2
  $region1: #{tpu_custom_call.1} parent=0
    #allocation2 [shape = 'u8[8192]{0}', space=vmem, size = 0x2000, scoped, tag = 'input window, operand 0, single buffered']
    #allocation3 [shape = 's32[1]{0}', space=sflag, size = 0x4, scoped, tag = 'scoped memory for tpu_custom_call.1']
    #allocation4 [shape = 's32[1]{0}', space=sflag, size = 0x4, scoped, tag = 'scoped memory for tpu_custom_call.1']
    #allocation5 [shape = 'u8[8192]{0}', space=vmem, size = 0x2000, scoped, tag = 'output window, operand 0, single buffered']
    %6 = vsyncpa [#allocation3], 0
    %7 = vsyncpa [#allocation4], 0
    // Predicated region
    $region2: #{tpu_custom_call.1} parent=1 // pred_check
      _
    $region3: #{tpu_custom_call.1} parent=1 // pred_check_branch
      %9 = sbr.rel (0) target = $region5
    $region4: #{tpu_custom_call.1} parent=1 // pred_region
      %s11 = ssub.s32 256, 256
      %12 = vsyncadd [#allocation3], %s11
      %s13 = sshll.u32 [#allocation2], 4
      %s14 = int_to_ptr.vmem [resolvable:$true] %s13
      %19 = dma.hbm_to_vmem [thread:$0]  %s0, 256, %s14, [#allocation3], 128, 128, 8
    $region5: #{tpu_custom_call.1} parent=1 // pred_fallthru
      _
    // Predicated region
    $region6: #{tpu_custom_call.1} parent=1 // pred_check
      _
    $region7: #{tpu_custom_call.1} parent=1 // pred_check_branch
      %21 = sbr.rel (0) target = $region9
    $region8: #{tpu_custom_call.1} parent=1 // pred_region
      %22 = dma.done [#allocation3], 256
    $region9: #{tpu_custom_call.1} parent=1 // pred_fallthru
      _
    %v23 = vld [vmem:[#allocation2] sm:$0xff]
    %v24 = vld [vmem:[#allocation2 + $0x8] sm:$0xff]
    %v25 = vmul.f32 %v23, %v23
    %v26 = vmul.f32 %v24, %v24
    %v29 = vcombine.high %v25, %v25
    %v30 = vcombine.high %v26, %v26
    %vm33 = vcmask 1043456
    %v34 = vsel %vm33, %v25, 0.0
    %v35 = vrot.slane %v34, 4
    %v36 = vadd.f32 %v34, %v35
    %v37 = vrot.slane %v36, 2
    %v38 = vadd.f32 %v36, %v37
    %v39 = vrot.slane %v38, 1
    %v40 = vadd.f32 %v38, %v39
    %v41 = vsel %vm33, %v29, 0.0
    %v42 = vrot.slane %v41, 4
    %v43 = vadd.f32 %v41, %v42
    %v44 = vrot.slane %v43, 2
    %v45 = vadd.f32 %v43, %v44
    %v46 = vrot.slane %v45, 1
    %v47 = vadd.f32 %v45, %v46
    %v48 = vsel %vm33, %v26, 0.0
    %v49 = vrot.slane %v48, 4
    %v50 = vadd.f32 %v48, %v49
    %v51 = vrot.slane %v50, 2
    %v52 = vadd.f32 %v50, %v51
    %v53 = vrot.slane %v52, 1
    %v54 = vadd.f32 %v52, %v53
    %v55 = vsel %vm33, %v30, 0.0
    %v56 = vrot.slane %v55, 4
    %v57 = vadd.f32 %v55, %v56
    %v58 = vrot.slane %v57, 2
    %v59 = vadd.f32 %v57, %v58
    %v60 = vrot.slane %v59, 1
    %v61 = vadd.f32 %v59, %v60
    %v62 = vrsqrt.pop %v40
    %v63 = vmul.f32 %v40, %v62
    %vm64 = vcmp.eq.f32.partialorder %v40, inf
    %v65 = vsel %vm64, %v40, %v63
    %vm66 = vcmp.eq.f32.partialorder %v40, 0.0
    %v67 = vand.u32 %v40, 2147483648
    %v68 = vsel %vm66, %v67, %v65
    %v69 = vrsqrt.pop %v47
    %v70 = vmul.f32 %v47, %v69
    %vm71 = vcmp.eq.f32.partialorder %v47, inf
    %v72 = vsel %vm71, %v47, %v70
    %vm73 = vcmp.eq.f32.partialorder %v47, 0.0
    %v74 = vand.u32 %v47, 2147483648
    %v75 = vsel %vm73, %v74, %v72
    %v76 = vrsqrt.pop %v54
    %v77 = vmul.f32 %v54, %v76
    %vm78 = vcmp.eq.f32.partialorder %v54, inf
    %v79 = vsel %vm78, %v54, %v77
    %vm80 = vcmp.eq.f32.partialorder %v54, 0.0
    %v81 = vand.u32 %v54, 2147483648
    %v82 = vsel %vm80, %v81, %v79
    %v83 = vrsqrt.pop %v61
    %v84 = vmul.f32 %v61, %v83
    %vm85 = vcmp.eq.f32.partialorder %v61, inf
    %v86 = vsel %vm85, %v61, %v84
    %vm87 = vcmp.eq.f32.partialorder %v61, 0.0
    %v88 = vand.u32 %v61, 2147483648
    %v89 = vsel %vm87, %v88, %v86
    %v90 = vadd.f32 %v68, 1e-07
    %v91 = vadd.f32 %v75, 1e-07
    %v92 = vadd.f32 %v82, 1e-07
    %v93 = vadd.f32 %v89, 1e-07
    %v94 = vrcp.pop %v90
    %v95 = vrcp.pop %v91
    %v96 = vrcp.pop %v92
    %v97 = vrcp.pop %v93
    %v102 = vcombine.low %v94, %v95
    %v103 = vcombine.low %v96, %v97
    %v106 = vmul.f32 %v23, %v102
    %v107 = vmul.f32 %v24, %v103
    %108 = vst [vmem:[#allocation5] sm:$0xff] %v106
    %109 = vst [vmem:[#allocation5 + $0x8] sm:$0xff] %v107
    // Predicated region
    $region10: #{tpu_custom_call.1} parent=1 // pred_check
      _
    $region11: #{tpu_custom_call.1} parent=1 // pred_check_branch
      %111 = sbr.rel (0) target = $region13
    $region12: #{tpu_custom_call.1} parent=1 // pred_region
      %s113 = ssub.s32 256, 256
      %114 = vsyncadd [#allocation4], %s113
      %s115 = sshll.u32 [#allocation5], 4
      %s116 = int_to_ptr.vmem [resolvable:$true] %s115
      %121 = dma.vmem_to_hbm [thread:$0]  %s116, 256, %s1, [#allocation4], 128, 128, 8
    $region13: #{tpu_custom_call.1} parent=1 // pred_fallthru
      _
    // Predicated region
    $region14: #{tpu_custom_call.1} parent=1 // pred_check
      _
    $region15: #{tpu_custom_call.1} parent=1 // pred_check_branch
      %123 = sbr.rel (0) target = $region17
    $region16: #{tpu_custom_call.1} parent=1 // pred_region
      %124 = dma.done [#allocation4], 256
    $region17: #{tpu_custom_call.1} parent=1 // pred_fallthru
      _
    %125 = vsyncpa [#allocation3], 1
    %126 = vsyncpa [#allocation4], 1

</llo_original>
